<compile_context>
chip_gen: v6e
topology: v6e:2x2x1
jax: 0.10.0
libtpu: 0.0.40
codegen_flags: <defaults>
</compile_context>

<pallas_src>
import math

import jax
import jax.numpy as jnp
from jax import lax
from jax.experimental import pallas as pl
from jax.experimental.pallas import tpu as pltpu

LN_EPS = 1e-5
_MIB = 1024 * 1024
# Keep the fully-resident path only while it comfortably fits v7x's 64 MiB VMEM.
_RESIDENT_VMEM_BUDGET = 40 * _MIB
_VMEM_LIMIT_CAP = 56 * _MIB


# ----------------------------- kernel helpers ------------------------------


def _activate(h, activation_fn):
    if activation_fn == "relu":
        return jnp.maximum(h, 0.0)
    # PyTorch nn.GELU default is the exact erf form.
    # TODO(synk): gelu path is not exercised by the __main__ smoke test.
    return jax.nn.gelu(h, approximate=False)


def _layernorm(y, gamma, beta):
    # One-pass statistics: var = E[y^2] - E[y]^2 (guarded against cancellation).
    mean = jnp.mean(y, axis=-1, keepdims=True)
    mean_sq = jnp.mean(y * y, axis=-1, keepdims=True)
    var = jnp.maximum(mean_sq - mean * mean, 0.0)
    inv = lax.rsqrt(var + LN_EPS)                     # EUP slot (free w.r.t. VPU)
    return (y - mean) * inv * gamma + beta


def _make_resident_kernel(activation_fn):
    """All weights VMEM-resident; one grid axis over row tiles."""

    def kernel(x_ref, w1_ref, b1_ref, w2_ref, b2_ref, g_ref, beta_ref, o_ref):
        x = x_ref[...]                                                 # bf16
        h = jnp.dot(x, w1_ref[...],
                    preferred_element_type=jnp.float32) + b1_ref[...]
        h = _activate(h, activation_fn)
        y = jnp.dot(h.astype(w2_ref.dtype), w2_ref[...],
                    preferred_element_type=jnp.float32)
        y = y + b2_ref[...] + x.astype(jnp.float32)                    # residual
        o_ref[...] = _layernorm(y, g_ref[...], beta_ref[...]).astype(o_ref.dtype)

    return kernel


def _make_chunked_kernel(activation_fn):
    """W1/W2 streamed in hidden-dim chunks; f32 accumulator in VMEM scratch."""

    def kernel(x_ref, w1_ref, b1_ref, w2_ref, b2_ref, g_ref, beta_ref, o_ref,
               acc_ref):
        hk = pl.program_id(1)

        @pl.when(hk == 0)
        def _():
            acc_ref[...] = jnp.zeros_like(acc_ref)

        x = x_ref[...]                                                 # bf16
        h = jnp.dot(x, w1_ref[...],
                    preferred_element_type=jnp.float32) + b1_ref[...]
        h = _activate(h, activation_fn)
        acc_ref[...] += jnp.dot(h.astype(w2_ref.dtype), w2_ref[...],
                                preferred_element_type=jnp.float32)

        @pl.when(hk == pl.num_programs(1) - 1)
        def _():
            y = acc_ref[...] + b2_ref[...] + x.astype(jnp.float32)
            o_ref[...] = _layernorm(y, g_ref[...],
                                    beta_ref[...]).astype(o_ref.dtype)

    return kernel


# ------------------------------ tiling helpers ------------------------------


def _round_up(v, m):
    return ((v + m - 1) // m) * m


def _choose_row_tile(m, max_tile=512):
    """Balanced, sublane-aligned row tile; even tile count when > 1 (v7x 2 TC)."""
    n = pl.cdiv(m, max_tile)
    if n > 1 and n % 2 == 1:
        n += 1
    return max(_round_up(pl.cdiv(m, n), 16), 16)


def _choose_h_tile(hidden, max_tile):
    if hidden % 128 != 0:
        return hidden  # TODO(synk): pad hidden to a lane multiple for chunking
    tile = min(_round_up(max_tile, 128), hidden)
    while hidden % tile != 0:
        tile -= 128
    return tile


def _vmem_estimate(tile_m, d_model, hidden, tile_h, chunked, in_bytes, out_bytes):
    io = 2 * tile_m * d_model * (in_bytes + out_bytes)   # double-buffered x / out
    small = 3 * d_model * 4                              # b2, gamma, beta (f32)
    if chunked:
        w = 2 * 2 * d_model * tile_h * 2                 # double-buffered bf16 chunks
        b1 = 2 * tile_h * 4
        scratch = tile_m * d_model * 4                   # f32 accumulator
        h_tmp = tile_m * tile_h * 4
    else:
        w = 2 * d_model * hidden * 2                     # single-buffered bf16 W1+W2
        b1 = hidden * 4
        scratch = 0
        h_tmp = tile_m * hidden * 4                      # f32 hidden intermediate
    return io + small + w + b1 + scratch + h_tmp


# --------------------------------- wrapper ----------------------------------


def ffn_forward(params, x, activation_fn="relu", *,
                force_chunked=False, max_h_tile=1024):
    """
    x: (B, S, d_model)
    params: w1 (D,H), b1 (1,H), w2 (H,D), b2 (1,D), gamma (1,D), beta (1,D)
    returns (B, S, d_model) in x.dtype
    """
    B, S, D = x.shape
    H = params["w1"].shape[1]
    M = B * S
    out_dtype = x.dtype

    tile_m = _choose_row_tile(M)
    m_pad = pl.cdiv(M, tile_m) * tile_m
    grid_m = m_pad // tile_m

    # bf16 operands for the MXU; epilogue math stays f32 inside the kernel.
    x2 = x.reshape(M, D).astype(jnp.bfloat16)
    if m_pad != M:
        # TODO(synk): an in-kernel row mask on the ragged last block would avoid
        # this extra HBM pass; the balanced tile keeps the pad small (often 0).
        x2 = jnp.pad(x2, ((0, m_pad - M), (0, 0)))

    w1 = params["w1"].astype(jnp.bfloat16)
    w2 = params["w2"].astype(jnp.bfloat16)
    b1 = params["b1"].astype(jnp.float32)
    b2 = params["b2"].astype(jnp.float32)
    gamma = params["gamma"].astype(jnp.float32)
    beta = params["beta"].astype(jnp.float32)

    in_bytes, out_bytes = 2, jnp.dtype(out_dtype).itemsize

    resident_bytes = _vmem_estimate(tile_m, D, H, H, False, in_bytes, out_bytes)
    use_chunked = force_chunked or resident_bytes > _RESIDENT_VMEM_BUDGET

    if use_chunked:
        tile_h = _choose_h_tile(H, max_h_tile)
        kernel = _make_chunked_kernel(activation_fn)
        grid_spec = pltpu.PrefetchScalarGridSpec(
            num_scalar_prefetch=0,
            grid=(grid_m, H // tile_h),
            in_specs=[
                pl.BlockSpec((tile_m, D), lambda i, h: (i, 0)),      # x rows
                pl.BlockSpec((D, tile_h), lambda i, h: (0, h)),      # W1 chunk
                pl.BlockSpec((1, tile_h), lambda i, h: (0, h)),      # b1 chunk
                pl.BlockSpec((tile_h, D), lambda i, h: (h, 0)),      # W2 chunk
                pl.BlockSpec((1, D), lambda i, h: (0, 0),
                             pipeline_mode=pl.Buffered(1)),          # b2
                pl.BlockSpec((1, D), lambda i, h: (0, 0),
                             pipeline_mode=pl.Buffered(1)),          # gamma
                pl.BlockSpec((1, D), lambda i, h: (0, 0),
                             pipeline_mode=pl.Buffered(1)),          # beta
            ],
            out_specs=pl.BlockSpec((tile_m, D), lambda i, h: (i, 0)),
            scratch_shapes=[pltpu.VMEM((tile_m, D), jnp.float32)],
        )
        dim_sem = ("parallel", "arbitrary")
        est = _vmem_estimate(tile_m, D, H, tile_h, True, in_bytes, out_bytes)
    else:
        kernel = _make_resident_kernel(activation_fn)
        resident = dict(pipeline_mode=pl.Buffered(1))   # single-buffer residents
        grid_spec = pltpu.PrefetchScalarGridSpec(
            num_scalar_prefetch=0,
            grid=(grid_m,),
            in_specs=[
                pl.BlockSpec((tile_m, D), lambda i: (i, 0)),         # x rows
                pl.BlockSpec((D, H), lambda i: (0, 0), **resident),  # W1
                pl.BlockSpec((1, H), lambda i: (0, 0), **resident),  # b1
                pl.BlockSpec((H, D), lambda i: (0, 0), **resident),  # W2
                pl.BlockSpec((1, D), lambda i: (0, 0), **resident),  # b2
                pl.BlockSpec((1, D), lambda i: (0, 0), **resident),  # gamma
                pl.BlockSpec((1, D), lambda i: (0, 0), **resident),  # beta
            ],
            out_specs=pl.BlockSpec((tile_m, D), lambda i: (i, 0)),
        )
        dim_sem = ("parallel",)
        est = resident_bytes

    vmem_limit = int(min(max(2 * est, 32 * _MIB), _VMEM_LIMIT_CAP))

    flops = 4 * m_pad * D * H + 10 * m_pad * D
    bytes_accessed = (m_pad * D * (in_bytes + out_bytes)
                      + 2 * D * H * 2 + (H + 3 * D) * 4)
    transcendentals = 0 if activation_fn == "relu" else m_pad * H

    out = pl.pallas_call(
        kernel,
        out_shape=jax.ShapeDtypeStruct((m_pad, D), out_dtype),
        grid_spec=grid_spec,
        compiler_params=pltpu.CompilerParams(
            dimension_semantics=dim_sem,
            vmem_limit_bytes=vmem_limit),
        cost_estimate=pl.CostEstimate(
            flops=flops,
            transcendentals=transcendentals,
            bytes_accessed=bytes_accessed),
    )(x2, w1, b1, w2, b2, gamma, beta)

    return out[:M].reshape(B, S, D)


# ------------------------------ init / reference ----------------------------


def _linear_init(key, fan_in, fan_out):
    """PyTorch nn.Linear default init (kaiming-uniform-ish bounds)."""
    kw, kb = jax.random.split(key)
    bound = 1.0 / math.sqrt(fan_in)
    w = jax.random.uniform(kw, (fan_in, fan_out), jnp.float32, -bound, bound)
    b = jax.random.uniform(kb, (1, fan_out), jnp.float32, -bound, bound)
    return w, b


def _reference_ffn(params, x, activation_fn="relu"):
    """Pure-JAX reference using the same bf16-operand / f32-accumulate matmuls."""
    xb = x.astype(jnp.bfloat16)
    w1 = params["w1"].astype(jnp.bfloat16)
    w2 = params["w2"].astype(jnp.bfloat16)
    h = jnp.dot(xb, w1, preferred_element_type=jnp.float32) + params["b1"]
    if activation_fn == "relu":
        h = jnp.maximum(h, 0.0)
    else:
        h = jax.nn.gelu(h, approximate=False)
    y = jnp.dot(h.astype(jnp.bfloat16), w2, preferred_element_type=jnp.float32)
    y = y + params["b2"] + xb.astype(jnp.float32)
    mean = jnp.mean(y, axis=-1, keepdims=True)
    var = jnp.mean((y - mean) ** 2, axis=-1, keepdims=True)
    out = (y - mean) * lax.rsqrt(var + LN_EPS) * params["gamma"] + params["beta"]
    return out.astype(x.dtype)


# ----------------------------------- main ------------------------------------


if __name__ == "__main__":
    B, S, d_model, hidden = 2, 8, 128, 256   # lane-dense feature dims

    key = jax.random.PRNGKey(0)
    kx, k1, k2 = jax.random.split(key, 3)

    x = jax.random.normal(kx, (B, S, d_model), jnp.float32)

    w1, b1 = _linear_init(k1, d_model, hidden)
    w2, b2 = _linear_init(k2, hidden, d_model)
    params = {
        "w1": w1, "b1": b1,
        "w2": w2, "b2": b2,
        "gamma": jnp.ones((1, d_model), jnp.float32),
        "beta": jnp.zeros((1, d_model), jnp.float32),
    }

    ref = _reference_ffn(params, x, activation_fn="relu")

    # Fully-resident weights path (default for shapes that fit VMEM).
    out = ffn_forward(params, x, activation_fn="relu")
    jax.block_until_ready(out)
    assert out.shape == (B, S, d_model)
    assert bool(jnp.all(jnp.isfinite(out)))
    assert bool(jnp.allclose(out, ref, atol=2e-3, rtol=2e-3))
    # LayerNorm invariant (gamma=1, beta=0): per-row mean ~ 0.
    assert bool(jnp.allclose(jnp.mean(out, axis=-1), 0.0, atol=1e-4))

    # H-chunked accumulation path (the v7x large-model fallback), forced here
    # with small hidden chunks so it is exercised and verified too.
    out_c = ffn_forward(params, x, activation_fn="relu",
                        force_chunked=True, max_h_tile=128)
    jax.block_until_ready(out_c)
    assert bool(jnp.allclose(out_c, ref, atol=2e-3, rtol=2e-3))

    print("KERNEL_OK")
</pallas_src>

<mosaic_0001>
module attributes {stable_mosaic.version = 11 : i64} {
  func.func @kernel(%arg0: i32, %arg1: memref<16x128xbf16, #tpu.memory_space<vmem>>, %arg2: memref<128x256xbf16, #tpu.memory_space<vmem>>, %arg3: memref<1x256xf32, #tpu.memory_space<vmem>>, %arg4: memref<256x128xbf16, #tpu.memory_space<vmem>>, %arg5: memref<1x128xf32, #tpu.memory_space<vmem>>, %arg6: memref<1x128xf32, #tpu.memory_space<vmem>>, %arg7: memref<1x128xf32, #tpu.memory_space<vmem>>, %arg8: memref<16x128xf32, #tpu.memory_space<vmem>>) attributes {dimension_semantics = [#tpu.dimension_semantics<parallel>], iteration_bounds = array<i64: 1>, scalar_prefetch = 0 : i64, scratch_operands = 0 : i64, tpu.core_type = #tpu.core_type<tc>, window_params = [{transform_indices = @transform_0, window_bounds = array<i64: 16, 128>}, {pipeline_mode = #tpu.pipeline_mode<synchronous>, transform_indices = @transform_1, window_bounds = array<i64: 128, 256>}, {pipeline_mode = #tpu.pipeline_mode<synchronous>, transform_indices = @transform_2, window_bounds = array<i64: 1, 256>}, {pipeline_mode = #tpu.pipeline_mode<synchronous>, transform_indices = @transform_3, window_bounds = array<i64: 256, 128>}, {pipeline_mode = #tpu.pipeline_mode<synchronous>, transform_indices = @transform_4, window_bounds = array<i64: 1, 128>}, {pipeline_mode = #tpu.pipeline_mode<synchronous>, transform_indices = @transform_5, window_bounds = array<i64: 1, 128>}, {pipeline_mode = #tpu.pipeline_mode<synchronous>, transform_indices = @transform_6, window_bounds = array<i64: 1, 128>}, {transform_indices = @transform_7, window_bounds = array<i64: 16, 128>}]} {
    %c0 = arith.constant 0 : index
    %c0_0 = arith.constant 0 : index
    %0 = vector.load %arg1[%c0, %c0_0] : memref<16x128xbf16, #tpu.memory_space<vmem>>, vector<16x128xbf16>
    %c0_1 = arith.constant 0 : index
    %c0_2 = arith.constant 0 : index
    %1 = vector.load %arg2[%c0_1, %c0_2] : memref<128x256xbf16, #tpu.memory_space<vmem>>, vector<128x256xbf16>
    %cst = arith.constant dense<0.000000e+00> : vector<16x256xf32>
    %2 = tpu.matmul %0, %1, %cst {dimension_numbers = #tpu.dot_dimension_numbers<[1], [0], [0], [1], [0, 0, 1, 1], [], []>} : vector<16x128xbf16>, vector<128x256xbf16>, vector<16x256xf32> -> vector<16x256xf32>
    %c0_3 = arith.constant 0 : index
    %c0_4 = arith.constant 0 : index
    %3 = vector.load %arg3[%c0_3, %c0_4] : memref<1x256xf32, #tpu.memory_space<vmem>>, vector<1x256xf32>
    %4 = vector.broadcast %3 : vector<1x256xf32> to vector<16x256xf32>
    %5 = arith.addf %2, %4 : vector<16x256xf32>
    %cst_5 = arith.constant 0.000000e+00 : f32
    %6 = vector.broadcast %cst_5 : f32 to vector<16x256xf32>
    %7 = arith.maximumf %5, %6 : vector<16x256xf32>
    %8 = arith.truncf %7 : vector<16x256xf32> to vector<16x256xbf16>
    %c0_6 = arith.constant 0 : index
    %c0_7 = arith.constant 0 : index
    %9 = vector.load %arg4[%c0_6, %c0_7] : memref<256x128xbf16, #tpu.memory_space<vmem>>, vector<256x128xbf16>
    %cst_8 = arith.constant dense<0.000000e+00> : vector<16x128xf32>
    %10 = tpu.matmul %8, %9, %cst_8 {dimension_numbers = #tpu.dot_dimension_numbers<[1], [0], [0], [1], [0, 0, 1, 1], [], []>} : vector<16x256xbf16>, vector<256x128xbf16>, vector<16x128xf32> -> vector<16x128xf32>
    %c0_9 = arith.constant 0 : index
    %c0_10 = arith.constant 0 : index
    %11 = vector.load %arg5[%c0_9, %c0_10] : memref<1x128xf32, #tpu.memory_space<vmem>>, vector<1x128xf32>
    %12 = vector.broadcast %11 : vector<1x128xf32> to vector<16x128xf32>
    %13 = arith.addf %10, %12 : vector<16x128xf32>
    %14 = arith.extf %0 : vector<16x128xbf16> to vector<16x128xf32>
    %15 = arith.addf %13, %14 : vector<16x128xf32>
    %c0_11 = arith.constant 0 : index
    %c0_12 = arith.constant 0 : index
    %16 = vector.load %arg6[%c0_11, %c0_12] : memref<1x128xf32, #tpu.memory_space<vmem>>, vector<1x128xf32>
    %c0_13 = arith.constant 0 : index
    %c0_14 = arith.constant 0 : index
    %17 = vector.load %arg7[%c0_13, %c0_14] : memref<1x128xf32, #tpu.memory_space<vmem>>, vector<1x128xf32>
    %cst_15 = arith.constant dense<0.000000e+00> : vector<16xf32>
    %18 = vector.multi_reduction <add>, %15, %cst_15 [1] : vector<16x128xf32> to vector<16xf32>
    %19 = vector.shape_cast %18 : vector<16xf32> to vector<16x1xf32>
    %cst_16 = arith.constant 1.280000e+02 : f32
    %20 = vector.broadcast %cst_16 : f32 to vector<16x1xf32>
    %21 = arith.divf %19, %20 : vector<16x1xf32>
    %22 = arith.mulf %15, %15 : vector<16x128xf32>
    %cst_17 = arith.constant dense<0.000000e+00> : vector<16xf32>
    %23 = vector.multi_reduction <add>, %22, %cst_17 [1] : vector<16x128xf32> to vector<16xf32>
    %24 = vector.shape_cast %23 : vector<16xf32> to vector<16x1xf32>
    %cst_18 = arith.constant 1.280000e+02 : f32
    %25 = vector.broadcast %cst_18 : f32 to vector<16x1xf32>
    %26 = arith.divf %24, %25 : vector<16x1xf32>
    %27 = arith.mulf %21, %21 : vector<16x1xf32>
    %28 = arith.subf %26, %27 : vector<16x1xf32>
    %cst_19 = arith.constant 0.000000e+00 : f32
    %29 = vector.broadcast %cst_19 : f32 to vector<16x1xf32>
    %30 = arith.maximumf %28, %29 : vector<16x1xf32>
    %cst_20 = arith.constant 9.99999974E-6 : f32
    %31 = vector.broadcast %cst_20 : f32 to vector<16x1xf32>
    %32 = arith.addf %30, %31 : vector<16x1xf32>
    %33 = math.rsqrt %32 : vector<16x1xf32>
    %34 = vector.broadcast %21 : vector<16x1xf32> to vector<16x128xf32>
    %35 = arith.subf %15, %34 : vector<16x128xf32>
    %36 = vector.broadcast %33 : vector<16x1xf32> to vector<16x128xf32>
    %37 = arith.mulf %35, %36 : vector<16x128xf32>
    %38 = vector.broadcast %16 : vector<1x128xf32> to vector<16x128xf32>
    %39 = arith.mulf %37, %38 : vector<16x128xf32>
    %40 = vector.broadcast %17 : vector<1x128xf32> to vector<16x128xf32>
    %41 = arith.addf %39, %40 : vector<16x128xf32>
    %c0_21 = arith.constant 0 : index
    %c0_22 = arith.constant 0 : index
    %42 = vector.load %arg8[%c0_21, %c0_22] : memref<16x128xf32, #tpu.memory_space<vmem>>, vector<16x128xf32>
    tpu.vector_store %arg8[%c0_21, %c0_22], %41 {strides = array<i32>} : memref<16x128xf32, #tpu.memory_space<vmem>>, vector<16x128xf32>,
    return
  }
  func.func @transform_0(%arg0: i32) -> (i32, i32) {
    %c0_i32 = arith.constant 0 : i32
    %c0_i32_0 = arith.constant 0 : i32
    return %arg0, %c0_i32 : i32, i32
  }
  func.func @transform_1(%arg0: i32) -> (i32, i32) {
    %c0_i32 = arith.constant 0 : i32
    %c0_i32_0 = arith.constant 0 : i32
    %c0_i32_1 = arith.constant 0 : i32
    return %c0_i32, %c0_i32_0 : i32, i32
  }
  func.func @transform_2(%arg0: i32) -> (i32, i32) {
    %c0_i32 = arith.constant 0 : i32
    %c0_i32_0 = arith.constant 0 : i32
    %c0_i32_1 = arith.constant 0 : i32
    return %c0_i32, %c0_i32_0 : i32, i32
  }
  func.func @transform_3(%arg0: i32) -> (i32, i32) {
    %c0_i32 = arith.constant 0 : i32
    %c0_i32_0 = arith.constant 0 : i32
    %c0_i32_1 = arith.constant 0 : i32
    return %c0_i32, %c0_i32_0 : i32, i32
  }
  func.func @transform_4(%arg0: i32) -> (i32, i32) {
    %c0_i32 = arith.constant 0 : i32
    %c0_i32_0 = arith.constant 0 : i32
    %c0_i32_1 = arith.constant 0 : i32
    return %c0_i32, %c0_i32_0 : i32, i32
  }
  func.func @transform_5(%arg0: i32) -> (i32, i32) {
    %c0_i32 = arith.constant 0 : i32
    %c0_i32_0 = arith.constant 0 : i32
    %c0_i32_1 = arith.constant 0 : i32
    return %c0_i32, %c0_i32_0 : i32, i32
  }
  func.func @transform_6(%arg0: i32) -> (i32, i32) {
    %c0_i32 = arith.constant 0 : i32
    %c0_i32_0 = arith.constant 0 : i32
    %c0_i32_1 = arith.constant 0 : i32
    return %c0_i32, %c0_i32_0 : i32, i32
  }
  func.func @transform_7(%arg0: i32) -> (i32, i32) {
    %c0_i32 = arith.constant 0 : i32
    %c0_i32_0 = arith.constant 0 : i32
    return %arg0, %c0_i32 : i32, i32
  }
}

</mosaic_0001>

<llo_original>
// kernel: tpu_custom_call.1
$region0: #{tpu_custom_call.1}
  #allocation0 [shape = 'u32[]', space=smem, size = 0x4, offset = 0x4, fixed_abs, tag = 'smem constant byte address 0x4 - core index']
  #allocation1 [shape = 'u32[144,128]{1,0:T(1,128)}', space=vmem, size = 0x12000, scoped, tag = 'internal scratch']
  %s0 = inlined_call_operand.hbm [shape: bf16[16,128], index: 0, kind: input, shape index: {}]
  %s1 = inlined_call_operand.hbm [shape: bf16[128,256], index: 1, kind: input, shape index: {}]
  %s2 = inlined_call_operand.vmem [shape: f32[1,256], index: 2, kind: input, shape index: {}]
  %s3 = inlined_call_operand.hbm [shape: bf16[256,128], index: 3, kind: input, shape index: {}]
  %s4 = inlined_call_operand.vmem [shape: f32[1,128], index: 4, kind: input, shape index: {}]
  %s5 = inlined_call_operand.vmem [shape: f32[1,128], index: 5, kind: input, shape index: {}]
  %s6 = inlined_call_operand.vmem [shape: f32[1,128], index: 6, kind: input, shape index: {}]
  %s7 = inlined_call_operand.hbm [shape: f32[16,128], index: 7, kind: output, shape index: {}]
  %s8 = sld [smem:[#allocation0]]
  $region50: #{tpu_custom_call.1} parent=0
    _
  %s10 = ssub.s32 1, %s8
  %s11 = scalar_select 0, %s10, %s8
  $region1: #{tpu_custom_call.1} parent=0
    #allocation2 [shape = 'u8[4096]{0}', space=vmem, size = 0x1000, scoped, tag = 'input window, operand 0, single buffered']
    #allocation3 [shape = 's32[1]{0}', space=sflag, size = 0x4, scoped, tag = 'scoped memory for tpu_custom_call.1']
    #allocation4 [shape = 's32[1]{0}', space=sflag, size = 0x4, scoped, tag = 'scoped memory for tpu_custom_call.1']
    #allocation5 [shape = 'u8[65536]{0}', space=vmem, size = 0x10000, scoped, tag = 'input window, operand 1, single buffered']
    #allocation6 [shape = 's32[1]{0}', space=sflag, size = 0x4, scoped, tag = 'scoped memory for tpu_custom_call.1']
    #allocation7 [shape = 'u8[65536]{0}', space=vmem, size = 0x10000, scoped, tag = 'input window, operand 3, single buffered']
    #allocation8 [shape = 'u8[8192]{0}', space=vmem, size = 0x2000, scoped, tag = 'output window, operand 0, single buffered']
    %12 = vsyncpa [#allocation3], 0
    %13 = vsyncpa [#allocation6], 0
    %14 = vsyncpa [#allocation4], 0
    // Predicated region
    $region2: #{tpu_custom_call.1} parent=1 // pred_check
      _
    $region3: #{tpu_custom_call.1} parent=1 // pred_check_branch
      %16 = sbr.rel (0) target = $region5
    $region4: #{tpu_custom_call.1} parent=1 // pred_region
      %s18 = ssub.s32 128, 128
      %19 = vsyncadd [#allocation3], %s18
      %s20 = sshll.u32 [#allocation2], 4
      %s21 = int_to_ptr.vmem [resolvable:$true] %s20
      %26 = dma.hbm_to_vmem [thread:$0]  %s0, 128, %s21, [#allocation3], 64, 64, 4
    $region5: #{tpu_custom_call.1} parent=1 // pred_fallthru
      _
    // Predicated region
    $region6: #{tpu_custom_call.1} parent=1 // pred_check
      _
    $region7: #{tpu_custom_call.1} parent=1 // pred_check_branch
      %28 = sbr.rel (0) target = $region9
    $region8: #{tpu_custom_call.1} parent=1 // pred_region
      %s30 = ssub.s32 2048, 2048
      %31 = vsyncadd [#allocation6], %s30
      %s32 = sshll.u32 [#allocation5], 4
      %s33 = int_to_ptr.vmem [resolvable:$true] %s32
      %38 = dma.hbm_to_vmem [thread:$0]  %s1, 2048, %s33, [#allocation6], 128, 128, 8
    $region9: #{tpu_custom_call.1} parent=1 // pred_fallthru
      _
    // Predicated region
    $region10: #{tpu_custom_call.1} parent=1 // pred_check
      _
    $region11: #{tpu_custom_call.1} parent=1 // pred_check_branch
      %40 = sbr.rel (0) target = $region13
    $region12: #{tpu_custom_call.1} parent=1 // pred_region
      _
    $region13: #{tpu_custom_call.1} parent=1 // pred_fallthru
      _
    // Predicated region
    $region14: #{tpu_custom_call.1} parent=1 // pred_check
      _
    $region15: #{tpu_custom_call.1} parent=1 // pred_check_branch
      %42 = sbr.rel (0) target = $region17
    $region16: #{tpu_custom_call.1} parent=1 // pred_region
      %s44 = ssub.s32 2048, 2048
      %45 = vsyncadd [#allocation6], %s44
      %s46 = sshll.u32 [#allocation7], 4
      %s47 = int_to_ptr.vmem [resolvable:$true] %s46
      %52 = dma.hbm_to_vmem [thread:$0]  %s3, 2048, %s47, [#allocation6], 64, 64, 4
    $region17: #{tpu_custom_call.1} parent=1 // pred_fallthru
      _
    // Predicated region
    $region18: #{tpu_custom_call.1} parent=1 // pred_check
      _
    $region19: #{tpu_custom_call.1} parent=1 // pred_check_branch
      %54 = sbr.rel (0) target = $region21
    $region20: #{tpu_custom_call.1} parent=1 // pred_region
      _
    $region21: #{tpu_custom_call.1} parent=1 // pred_fallthru
      _
    // Predicated region
    $region22: #{tpu_custom_call.1} parent=1 // pred_check
      _
    $region23: #{tpu_custom_call.1} parent=1 // pred_check_branch
      %56 = sbr.rel (0) target = $region25
    $region24: #{tpu_custom_call.1} parent=1 // pred_region
      _
    $region25: #{tpu_custom_call.1} parent=1 // pred_fallthru
      _
    // Predicated region
    $region26: #{tpu_custom_call.1} parent=1 // pred_check
      _
    $region27: #{tpu_custom_call.1} parent=1 // pred_check_branch
      %58 = sbr.rel (0) target = $region29
    $region28: #{tpu_custom_call.1} parent=1 // pred_region
      _
    $region29: #{tpu_custom_call.1} parent=1 // pred_fallthru
      _
    // Predicated region
    $region30: #{tpu_custom_call.1} parent=1 // pred_check
      _
    $region31: #{tpu_custom_call.1} parent=1 // pred_check_branch
      %60 = sbr.rel (0) target = $region33
    $region32: #{tpu_custom_call.1} parent=1 // pred_region
      %61 = dma.done [#allocation3], 128
    $region33: #{tpu_custom_call.1} parent=1 // pred_fallthru
      _
    // Predicated region
    $region34: #{tpu_custom_call.1} parent=1 // pred_check
      _
    $region35: #{tpu_custom_call.1} parent=1 // pred_check_branch
      %63 = sbr.rel (0) target = $region37
    $region36: #{tpu_custom_call.1} parent=1 // pred_region
      %64 = dma.done [#allocation6], 2048
    $region37: #{tpu_custom_call.1} parent=1 // pred_fallthru
      _
    // Predicated region
    $region38: #{tpu_custom_call.1} parent=1 // pred_check
      _
    $region39: #{tpu_custom_call.1} parent=1 // pred_check_branch
      %66 = sbr.rel (0) target = $region41
    $region40: #{tpu_custom_call.1} parent=1 // pred_region
      %67 = dma.done [#allocation6], 2048
    $region41: #{tpu_custom_call.1} parent=1 // pred_fallthru
      _
    %v69 = vld [vmem:[#allocation2] sm:$0xf]
    %v70 = vld [vmem:[#allocation2 + $0x4] sm:$0xf]
    %v71 = vld [vmem:[#allocation5] sm:$0xff]
    %v72 = vld [vmem:[#allocation5 + $0x8] sm:$0xff]
    %v73 = vld [vmem:[#allocation5 + $0x10] sm:$0xff]
    %v74 = vld [vmem:[#allocation5 + $0x18] sm:$0xff]
    %v75 = vld [vmem:[#allocation5 + $0x20] sm:$0xff]
    %v76 = vld [vmem:[#allocation5 + $0x28] sm:$0xff]
    %v77 = vld [vmem:[#allocation5 + $0x30] sm:$0xff]
    %v78 = vld [vmem:[#allocation5 + $0x38] sm:$0xff]
    %v79 = vld [vmem:[#allocation5 + $0x40] sm:$0xff]
    %v80 = vld [vmem:[#allocation5 + $0x48] sm:$0xff]
    %v81 = vld [vmem:[#allocation5 + $0x50] sm:$0xff]
    %v82 = vld [vmem:[#allocation5 + $0x58] sm:$0xff]
    %v83 = vld [vmem:[#allocation5 + $0x60] sm:$0xff]
    %v84 = vld [vmem:[#allocation5 + $0x68] sm:$0xff]
    %v85 = vld [vmem:[#allocation5 + $0x70] sm:$0xff]
    %v86 = vld [vmem:[#allocation5 + $0x78] sm:$0xff]
    %v87 = vld [vmem:[%s2] sm:$0x3]
    %v89 = vlaneseq
    %v90 = vshrl.u32 %v89, 7
    %v91 = vsub.s32 0, %v90
    %v92 = vrot.slane %v87, %v91
    %v93 = vlaneseq
    %v94 = vshrl.u32 %v93, 7
    %v95 = vsub.s32 1, %v94
    %v96 = vrot.slane %v87, %v95
    %v101 = vunpack.c.l.b16 %v69
    %v102 = vunpack.c.l.b16 %v70
    %v103 = vpack.c.b16 %v102, %v101
    %v121 = vunpack.c.l.b16 %v71
    %v122 = vunpack.c.h.b16 %v71
    %v123 = vunpack.c.l.b16 %v72
    %v124 = vunpack.c.h.b16 %v72
    %v125 = vunpack.c.l.b16 %v73
    %v126 = vunpack.c.h.b16 %v73
    %v127 = vunpack.c.l.b16 %v74
    %v128 = vunpack.c.h.b16 %v74
    %v129 = vunpack.c.l.b16 %v75
    %v130 = vunpack.c.h.b16 %v75
    %v131 = vunpack.c.l.b16 %v76
    %v132 = vunpack.c.h.b16 %v76
    %v133 = vunpack.c.l.b16 %v77
    %v134 = vunpack.c.h.b16 %v77
    %v135 = vunpack.c.l.b16 %v78
    %v136 = vunpack.c.h.b16 %v78
    %v137 = vunpack.c.l.b16 %v79
    %v138 = vunpack.c.h.b16 %v79
    %v139 = vunpack.c.l.b16 %v80
    %v140 = vunpack.c.h.b16 %v80
    %v141 = vunpack.c.l.b16 %v81
    %v142 = vunpack.c.h.b16 %v81
    %v143 = vunpack.c.l.b16 %v82
    %v144 = vunpack.c.h.b16 %v82
    %v145 = vunpack.c.l.b16 %v83
    %v146 = vunpack.c.h.b16 %v83
    %v147 = vunpack.c.l.b16 %v84
    %v148 = vunpack.c.h.b16 %v84
    %v149 = vunpack.c.l.b16 %v85
    %v150 = vunpack.c.h.b16 %v85
    %v151 = vunpack.c.l.b16 %v86
    %v152 = vunpack.c.h.b16 %v86
    %v153 = vpack.c.b16 %v123, %v121
    %v154 = vpack.c.b16 %v124, %v122
    %v155 = vpack.c.b16 %v127, %v125
    %v156 = vpack.c.b16 %v128, %v126
    %v157 = vpack.c.b16 %v131, %v129
    %v158 = vpack.c.b16 %v132, %v130
    %v159 = vpack.c.b16 %v135, %v133
    %v160 = vpack.c.b16 %v136, %v134
    %v161 = vpack.c.b16 %v139, %v137
    %v162 = vpack.c.b16 %v140, %v138
    %v163 = vpack.c.b16 %v143, %v141
    %v164 = vpack.c.b16 %v144, %v142
    %v165 = vpack.c.b16 %v147, %v145
    %v166 = vpack.c.b16 %v148, %v146
    %v167 = vpack.c.b16 %v151, %v149
    %v168 = vpack.c.b16 %v152, %v150
    %185 = vmatprep.subr.bf16.mxu0 %v168
    %186 = vmatpush1.bf16.msra.mxu0 %v167
    %187 = vmatprep.subr.bf16.mxu0 %v166
    %188 = vmatpush1.bf16.msra.mxu0 %v165
    %189 = vmatprep.subr.bf16.mxu0 %v164
    %190 = vmatpush1.bf16.msra.mxu0 %v163
    %191 = vmatprep.subr.bf16.mxu0 %v162
    %192 = vmatpush1.bf16.msra.mxu0 %v161
    %193 = vmatprep.subr.bf16.mxu0 %v160
    %194 = vmatpush1.bf16.msra.mxu0 %v159
    %195 = vmatprep.subr.bf16.mxu0 %v158
    %196 = vmatpush1.bf16.msra.mxu0 %v157
    %197 = vmatprep.subr.bf16.mxu0 %v156
    %198 = vmatpush1.bf16.msra.mxu0 %v155
    %199 = vmatprep.subr.bf16.mxu0 %v154
    %200 = vmatpush1.bf16.msra.mxu0 %v153
    %201 = vmatprep.subr.bf16.mxu0 0
    %202 = vmatpush2.bf16.msra.mxu0 0
    %203 = vmatprep.subr.bf16.mxu0 0
    %204 = vmatpush2.bf16.msra.mxu0 0
    %205 = vmatprep.subr.bf16.mxu0 0
    %206 = vmatpush2.bf16.msra.mxu0 0
    %207 = vmatprep.subr.bf16.mxu0 0
    %208 = vmatpush2.bf16.msra.mxu0 0
    %209 = vmatprep.subr.bf16.mxu0 0
    %210 = vmatpush2.bf16.msra.mxu0 0
    %211 = vmatprep.subr.bf16.mxu0 0
    %212 = vmatpush2.bf16.msra.mxu0 0
    %213 = vmatprep.subr.bf16.mxu0 0
    %214 = vmatpush2.bf16.msra.mxu0 0
    %215 = vmatprep.subr.bf16.mxu0 0
    %216 = vmatpush2.bf16.msra.mxu0 0
    %217 = vmatprep.mubr.bf16.mxu0 0
    %218 = vmatmul.mubr.bf16.gmra.mxu0 %v103
    %v219 = vpop.f32.mrf.mxu0
    %v220 = vadd.f32 %v92, %v219
    %v221 = vpop.f32.mrf.mxu0
    %v222 = vadd.f32 %v96, %v221
    %v223 = vpop.f32.mrf.mxu0
    %v224 = vadd.f32 %v92, %v223
    %v225 = vpop.f32.mrf.mxu0
    %v226 = vadd.f32 %v96, %v225
    %227 = vdwg.mxu0
    %v228 = vmax.f32 %v220, 0.0
    %v229 = vmax.f32 %v222, 0.0
    %v230 = vmax.f32 %v224, 0.0
    %v231 = vmax.f32 %v226, 0.0
    %v232 = vpack.c.bf16 %v230, %v228
    %v233 = vpack.c.bf16 %v231, %v229
    %v234 = vld [vmem:[#allocation7] sm:$0xf]
    %v235 = vld [vmem:[#allocation7 + $0x4] sm:$0xf]
    %v236 = vld [vmem:[#allocation7 + $0x8] sm:$0xf]
    %v237 = vld [vmem:[#allocation7 + $0xc] sm:$0xf]
    %v238 = vld [vmem:[#allocation7 + $0x10] sm:$0xf]
    %v239 = vld [vmem:[#allocation7 + $0x14] sm:$0xf]
    %v240 = vld [vmem:[#allocation7 + $0x18] sm:$0xf]
    %v241 = vld [vmem:[#allocation7 + $0x1c] sm:$0xf]
    %v242 = vld [vmem:[#allocation7 + $0x20] sm:$0xf]
    %v243 = vld [vmem:[#allocation7 + $0x24] sm:$0xf]
    %v244 = vld [vmem:[#allocation7 + $0x28] sm:$0xf]
    %v245 = vld [vmem:[#allocation7 + $0x2c] sm:$0xf]
    %v246 = vld [vmem:[#allocation7 + $0x30] sm:$0xf]
    %v247 = vld [vmem:[#allocation7 + $0x34] sm:$0xf]
    %v248 = vld [vmem:[#allocation7 + $0x38] sm:$0xf]
    %v249 = vld [vmem:[#allocation7 + $0x3c] sm:$0xf]
    %v250 = vld [vmem:[#allocation7 + $0x40] sm:$0xf]
    %v251 = vld [vmem:[#allocation7 + $0x44] sm:$0xf]
    %v252 = vld [vmem:[#allocation7 + $0x48] sm:$0xf]
    %v253 = vld [vmem:[#allocation7 + $0x4c] sm:$0xf]
    %v254 = vld [vmem:[#allocation7 + $0x50] sm:$0xf]
    %v255 = vld [vmem:[#allocation7 + $0x54] sm:$0xf]
    %v256 = vld [vmem:[#allocation7 + $0x58] sm:$0xf]
    %v257 = vld [vmem:[#allocation7 + $0x5c] sm:$0xf]
    %v258 = vld [vmem:[#allocation7 + $0x60] sm:$0xf]
    %v259 = vld [vmem:[#allocation7 + $0x64] sm:$0xf]
    %v260 = vld [vmem:[#allocation7 + $0x68] sm:$0xf]
    %v261 = vld [vmem:[#allocation7 + $0x6c] sm:$0xf]
    %v262 = vld [vmem:[#allocation7 + $0x70] sm:$0xf]
    %v263 = vld [vmem:[#allocation7 + $0x74] sm:$0xf]
    %v264 = vld [vmem:[#allocation7 + $0x78] sm:$0xf]
    %v265 = vld [vmem:[#allocation7 + $0x7c] sm:$0xf]
    %v266 = vld [vmem:[%s4] sm:$0x1]
    %v268 = vlaneseq
    %v269 = vshrl.u32 %v268, 7
    %v270 = vsub.s32 0, %v269
    %v271 = vrot.slane %v266, %v270
    %v305 = vunpack.c.l.b16 %v234
    %v306 = vunpack.c.l.b16 %v235
    %v307 = vunpack.c.l.b16 %v236
    %v308 = vunpack.c.l.b16 %v237
    %v309 = vunpack.c.l.b16 %v238
    %v310 = vunpack.c.l.b16 %v239
    %v311 = vunpack.c.l.b16 %v240
    %v312 = vunpack.c.l.b16 %v241
    %v313 = vunpack.c.l.b16 %v242
    %v314 = vunpack.c.l.b16 %v243
    %v315 = vunpack.c.l.b16 %v244
    %v316 = vunpack.c.l.b16 %v245
    %v317 = vunpack.c.l.b16 %v246
    %v318 = vunpack.c.l.b16 %v247
    %v319 = vunpack.c.l.b16 %v248
    %v320 = vunpack.c.l.b16 %v249
    %v321 = vunpack.c.l.b16 %v250
    %v322 = vunpack.c.l.b16 %v251
    %v323 = vunpack.c.l.b16 %v252
    %v324 = vunpack.c.l.b16 %v253
    %v325 = vunpack.c.l.b16 %v254
    %v326 = vunpack.c.l.b16 %v255
    %v327 = vunpack.c.l.b16 %v256
    %v328 = vunpack.c.l.b16 %v257
    %v329 = vunpack.c.l.b16 %v258
    %v330 = vunpack.c.l.b16 %v259
    %v331 = vunpack.c.l.b16 %v260
    %v332 = vunpack.c.l.b16 %v261
    %v333 = vunpack.c.l.b16 %v262
    %v334 = vunpack.c.l.b16 %v263
    %v335 = vunpack.c.l.b16 %v264
    %v336 = vunpack.c.l.b16 %v265
    %v337 = vpack.c.b16 %v306, %v305
    %v338 = vpack.c.b16 %v308, %v307
    %v339 = vpack.c.b16 %v310, %v309
    %v340 = vpack.c.b16 %v312, %v311
    %v341 = vpack.c.b16 %v314, %v313
    %v342 = vpack.c.b16 %v316, %v315
    %v343 = vpack.c.b16 %v318, %v317
    %v344 = vpack.c.b16 %v320, %v319
    %v345 = vpack.c.b16 %v322, %v321
    %v346 = vpack.c.b16 %v324, %v323
    %v347 = vpack.c.b16 %v326, %v325
    %v348 = vpack.c.b16 %v328, %v327
    %v349 = vpack.c.b16 %v330, %v329
    %v350 = vpack.c.b16 %v332, %v331
    %v351 = vpack.c.b16 %v334, %v333
    %v352 = vpack.c.b16 %v336, %v335
    %369 = vmatprep.subr.bf16.mxu0 0
    %370 = vmatpush1.bf16.msra.mxu0 %v344
    %371 = vmatprep.subr.bf16.mxu0 0
    %372 = vmatpush1.bf16.msra.mxu0 %v343
    %373 = vmatprep.subr.bf16.mxu0 0
    %374 = vmatpush1.bf16.msra.mxu0 %v342
    %375 = vmatprep.subr.bf16.mxu0 0
    %376 = vmatpush1.bf16.msra.mxu0 %v341
    %377 = vmatprep.subr.bf16.mxu0 0
    %378 = vmatpush1.bf16.msra.mxu0 %v340
    %379 = vmatprep.subr.bf16.mxu0 0
    %380 = vmatpush1.bf16.msra.mxu0 %v339
    %381 = vmatprep.subr.bf16.mxu0 0
    %382 = vmatpush1.bf16.msra.mxu0 %v338
    %383 = vmatprep.subr.bf16.mxu0 0
    %384 = vmatpush1.bf16.msra.mxu0 %v337
    %385 = vmatprep.subr.bf16.mxu0 0
    %386 = vmatpush2.bf16.msra.mxu0 %v352
    %387 = vmatprep.subr.bf16.mxu0 0
    %388 = vmatpush2.bf16.msra.mxu0 %v351
    %389 = vmatprep.subr.bf16.mxu0 0
    %390 = vmatpush2.bf16.msra.mxu0 %v350
    %391 = vmatprep.subr.bf16.mxu0 0
    %392 = vmatpush2.bf16.msra.mxu0 %v349
    %393 = vmatprep.subr.bf16.mxu0 0
    %394 = vmatpush2.bf16.msra.mxu0 %v348
    %395 = vmatprep.subr.bf16.mxu0 0
    %396 = vmatpush2.bf16.msra.mxu0 %v347
    %397 = vmatprep.subr.bf16.mxu0 0
    %398 = vmatpush2.bf16.msra.mxu0 %v346
    %399 = vmatprep.subr.bf16.mxu0 0
    %400 = vmatpush2.bf16.msra.mxu0 %v345
    %401 = vmatprep.mubr.bf16.mxu0 %v233
    %402 = vmatmul.mubr.bf16.gmra.mxu0 %v232
    %v403 = vpop.f32.mrf.mxu0
    %v404 = vadd.f32 %v271, %v403
    %v405 = vpop.f32.mrf.mxu0
    %v406 = vpop.f32.mrf.mxu0
    %v407 = vadd.f32 %v271, %v406
    %v408 = vpop.f32.mrf.mxu0
    %409 = vdwg.mxu0
    %v410 = vunpack.c.l.bf16 %v69
    %v411 = vunpack.c.l.bf16 %v70
    %v412 = vadd.f32 %v404, %v410
    %v413 = vadd.f32 %v407, %v411
    %v414 = vld [vmem:[%s5] sm:$0x1]
    %v415 = vld [vmem:[%s6] sm:$0x1]
    %416 = vadd.xlane.f32.xlu0 %v412
    %v417 = vpop.xlane.xlu0 %416
    %418 = vadd.xlane.f32.xlu0 %v413
    %v419 = vpop.xlane.xlu0 %418
    %v420 = vrcp.pop 128.0
    %v421 = vmul.f32 %v417, %v420
    %v422 = vmul.f32 %v419, %v420
    %v423 = vmul.f32 %v412, %v412
    %v424 = vmul.f32 %v413, %v413
    %425 = vadd.xlane.f32.xlu0 %v423
    %v426 = vpop.xlane.xlu0 %425
    %427 = vadd.xlane.f32.xlu0 %v424
    %v428 = vpop.xlane.xlu0 %427
    %v429 = vmul.f32 %v426, %v420
    %v430 = vmul.f32 %v428, %v420
    %v431 = vmul.f32 %v421, %v421
    %v432 = vmul.f32 %v422, %v422
    %v433 = vsub.f32 %v429, %v431
    %v434 = vsub.f32 %v430, %v432
    %v435 = vmax.f32 %v433, 0.0
    %v436 = vmax.f32 %v434, 0.0
    %v437 = vadd.f32 %v435, 1e-05
    %v438 = vadd.f32 %v436, 1e-05
    %v439 = vrsqrt.pop %v437
    %v440 = vrsqrt.pop %v438
    %v441 = vsub.f32 %v412, %v421
    %v442 = vsub.f32 %v413, %v422
    %v443 = vmul.f32 %v441, %v439
    %v444 = vmul.f32 %v442, %v440
    %v446 = vlaneseq
    %v447 = vshrl.u32 %v446, 7
    %v448 = vsub.s32 0, %v447
    %v449 = vrot.slane %v414, %v448
    %v451 = vmul.f32 %v443, %v449
    %v452 = vmul.f32 %v444, %v449
    %v454 = vlaneseq
    %v455 = vshrl.u32 %v454, 7
    %v456 = vsub.s32 0, %v455
    %v457 = vrot.slane %v415, %v456
    %v459 = vadd.f32 %v451, %v457
    %v460 = vadd.f32 %v452, %v457
    %461 = vst [vmem:[#allocation8] sm:$0xff] %v459
    %462 = vst [vmem:[#allocation8 + $0x8] sm:$0xff] %v460
    // Predicated region
    $region42: #{tpu_custom_call.1} parent=1 // pred_check
      _
    $region43: #{tpu_custom_call.1} parent=1 // pred_check_branch
      %464 = sbr.rel (0) target = $region45
    $region44: #{tpu_custom_call.1} parent=1 // pred_region
      %s466 = ssub.s32 256, 256
      %467 = vsyncadd [#allocation4], %s466
      %s468 = sshll.u32 [#allocation8], 4
      %s469 = int_to_ptr.vmem [resolvable:$true] %s468
      %474 = dma.vmem_to_hbm [thread:$0]  %s469, 256, %s7, [#allocation4], 128, 128, 8
    $region45: #{tpu_custom_call.1} parent=1 // pred_fallthru
      _
    // Predicated region
    $region46: #{tpu_custom_call.1} parent=1 // pred_check
      _
    $region47: #{tpu_custom_call.1} parent=1 // pred_check_branch
      %476 = sbr.rel (0) target = $region49
    $region48: #{tpu_custom_call.1} parent=1 // pred_region
      %477 = dma.done [#allocation4], 256
    $region49: #{tpu_custom_call.1} parent=1 // pred_fallthru
      _
    %478 = vsyncpa [#allocation3], 1
    %479 = vsyncpa [#allocation6], 1
    %480 = vsyncpa [#allocation4], 1

</llo_original>
